<compile_context>
chip_gen: v5e
topology: v5e:2x2
jax: 0.10.0
libtpu: 0.0.40
codegen_flags: <defaults>
</compile_context>

<pallas_src>
import numpy as np
import jax
import jax.numpy as jnp
from jax.experimental import pallas as pl
from jax.experimental.pallas import tpu as pltpu


# ---------------------------------------------------------------------------
# Weight construction (glue, plain numpy) — matches PyTorch's
# _upsample_bilinear2d_aa (antialias=True, align_corners=False).
# ---------------------------------------------------------------------------
def aa_bilinear_weight_matrix(in_size: int, out_size: int) -> np.ndarray:
    scale = in_size / out_size
    support = scale if scale >= 1.0 else 1.0
    invscale = (1.0 / scale) if scale >= 1.0 else 1.0
    w_mat = np.zeros((out_size, in_size), dtype=np.float32)
    for i in range(out_size):
        center = scale * (i + 0.5)
        xmin = int(max(center - support + 0.5, 0.0))
        xmax = int(min(center + support + 0.5, float(in_size)))
        js = np.arange(xmin, xmax, dtype=np.float64)
        w = np.clip(1.0 - np.abs((js - center + 0.5) * invscale), 0.0, None)
        total = w.sum()
        if total > 0.0:
            w = w / total
        w_mat[i, xmin:xmax] = w.astype(np.float32)
    return w_mat


def _round_up(x: int, m: int) -> int:
    return -(-x // m) * m


# ---------------------------------------------------------------------------
# Pallas kernel
# ---------------------------------------------------------------------------
def _resize_kernel(wh_ref, wwT_ref, img_ref, out_ref, tmp_ref):
    """Resize P planes: out[p] = Wh @ img[p] @ Ww^T (separable, bf16 MXU, f32 acc).

    wh_ref : (OH, H)      bf16   resident interpolation weights (rows)
    wwT_ref: (W, OWp)     bf16   resident interpolation weights (cols, lane-padded)
    img_ref: (P, H, W)    f32    input planes (cast to bf16 in-kernel)
    out_ref: (P, OH, OWp) f32    resized planes
    tmp_ref: (P*OH, W)    bf16   scratch: row-resized planes
    """
    P, H, W = img_ref.shape
    OH = wh_ref.shape[0]
    wh = wh_ref[...]

    # Row resize, per plane (N = unpadded W -> no FLOPs on pad lanes).
    for p in range(P):
        img_p = img_ref[p].astype(jnp.bfloat16)                 # in-kernel f32->bf16
        tmp_ref[p * OH:(p + 1) * OH, :] = jnp.dot(
            wh, img_p, preferred_element_type=jnp.float32).astype(jnp.bfloat16)

    # Column resize fused over all P planes: (P*OH, W) @ (W, OWp), lane-dense N.
    big = jnp.dot(tmp_ref[...], wwT_ref[...], preferred_element_type=jnp.float32)

    for p in range(P):
        out_ref[p] = big[p * OH:(p + 1) * OH, :].astype(out_ref.dtype)


# ---------------------------------------------------------------------------
# Wrapper
# ---------------------------------------------------------------------------
def _vmem_budget():
    """(tiling budget, vmem_limit_bytes, min grid steps) — generation aware."""
    try:
        cap = int(pltpu.get_tpu_info().vmem_capacity_bytes)
    except Exception:
        cap = 64 << 20                      # conservative (v7x-sized) default
    if cap <= (64 << 20):                   # v7x: 64 MiB physical, 2 TensorCores
        return 26 << 20, 40 << 20, 2
    return 80 << 20, 100 << 20, 1           # v5e / v6e: 128 MiB, 1 TensorCore


def _choose_plane_tile(n_planes, H, W, OH, OWp, budget_bytes, min_steps):
    """Largest divisor of n_planes whose per-step VMEM footprint fits the budget."""
    weights_bytes = 2 * (OH * H + W * OWp)                      # bf16, single-buffered

    def step_bytes(p):
        return (2 * p * H * W * 4           # f32 input block, double-buffered
                + 2 * p * OH * OWp * 4      # f32 output block, double-buffered
                + p * OH * W * 2            # bf16 row-resize scratch
                + p * (H * W * 2 + OH * W * 4 + OH * OWp * 4))  # in-kernel temps

    min_steps = max(1, min(min_steps, n_planes))
    best = 1
    for p in range(1, n_planes + 1):
        if p > 32:                           # bound loop unrolling / compile time
            break
        if n_planes % p:
            continue
        if n_planes // p < min_steps:
            break
        if weights_bytes + step_bytes(p) <= budget_bytes:
            best = p
    return best


def resize_images(images: jnp.ndarray, output_size: int) -> jnp.ndarray:
    """images: (B, C, H, W) float32 -> (B, C, output_size, output_size)."""
    B, C, H, W = images.shape
    assert H == W, "square-image batch assumed (original module resizes per image)"
    OH = OW = output_size
    OWp = _round_up(OW, 128)                                    # lane-dense output

    wh = jnp.asarray(aa_bilinear_weight_matrix(H, OH), dtype=jnp.bfloat16)   # (OH, H)
    ww = aa_bilinear_weight_matrix(W, OW)                                     # (OW, W)
    wwT_np = np.zeros((W, OWp), np.float32)
    wwT_np[:, :OW] = ww.T
    wwT = jnp.asarray(wwT_np, dtype=jnp.bfloat16)                             # (W, OWp)

    NP = B * C
    budget, vmem_limit, min_steps = _vmem_budget()
    P = _choose_plane_tile(NP, H, W, OH, OWp, budget, min_steps)
    n_steps = NP // P

    # Free reshape of a contiguous array (no HBM pass, no padding / concatenate).
    flat = images.reshape(NP, H, W)

    flops = 2 * NP * (OH * H * W + OH * W * OWp)
    bytes_accessed = NP * (H * W * 4 + OH * OWp * 4) + 2 * (OH * H + W * OWp)

    def run(single_buffer_weights):
        wkw = dict(pipeline_mode=pl.Buffered(1)) if single_buffer_weights else {}
        return pl.pallas_call(
            _resize_kernel,
            out_shape=jax.ShapeDtypeStruct((NP, OH, OWp), images.dtype),
            grid_spec=pltpu.PrefetchScalarGridSpec(
                num_scalar_prefetch=0,
                grid=(n_steps,),
                in_specs=[
                    pl.BlockSpec((OH, H), lambda i: (0, 0), **wkw),    # Wh (resident)
                    pl.BlockSpec((W, OWp), lambda i: (0, 0), **wkw),   # Ww^T (resident)
                    pl.BlockSpec((P, H, W), lambda i: (i, 0, 0)),      # f32 planes
                ],
                out_specs=pl.BlockSpec((P, OH, OWp), lambda i: (i, 0, 0)),
                scratch_shapes=[pltpu.VMEM((P * OH, W), jnp.bfloat16)],
            ),
            compiler_params=pltpu.CompilerParams(
                dimension_semantics=("parallel",),
                vmem_limit_bytes=vmem_limit),
            cost_estimate=pl.CostEstimate(flops=int(flops), transcendentals=0,
                                          bytes_accessed=int(bytes_accessed)),
        )(wh, wwT, flat)

    try:
        out = run(True)
    except Exception:
        # pl.Buffered(1)/pipeline_mode not supported in this jax build: fall back
        # to default double-buffered weights (correctness unchanged).
        out = run(False)

    if OWp != OW:
        # No-op view when output_size % 128 == 0; otherwise one trailing slice
        # (exact (OH, OW) output required by the module's semantics).
        out = out[:, :, :OW]
    return out.reshape(B, C, OH, OW)


def resize_forward(images: jnp.ndarray, targets, output_size: int):
    """Mirror of Resize.forward for a stack of same-sized square images."""
    B, C, H, W = images.shape
    resize_factor = jnp.float32(output_size / max(H, W))

    out_images = resize_images(images, output_size)

    # Boxes / areas: plain jnp (XLA fuses the cast + scalar multiply; a pallas
    # launch for a few hundred floats is pure launch overhead).
    out_targets = tuple(
        {"boxes": t["boxes"].astype(jnp.float32) * resize_factor,
         "area": t["area"].astype(jnp.float32) * resize_factor}
        for t in targets)
    return out_images, out_targets


# ---------------------------------------------------------------------------
if __name__ == "__main__":
    key = jax.random.PRNGKey(0)
    k_img, k_box, k_area = jax.random.split(key, 3)

    B, C, H, W = 2, 3, 16, 16
    OUTPUT_SIZE = 32
    N_BOXES = 5

    images = jax.random.uniform(k_img, (B, C, H, W), dtype=jnp.float32)
    targets = []
    for b in range(B):
        boxes = jax.random.uniform(
            jax.random.fold_in(k_box, b), (N_BOXES, 4),
            dtype=jnp.float32, minval=0.0, maxval=float(H))
        area = jax.random.uniform(
            jax.random.fold_in(k_area, b), (N_BOXES,),
            dtype=jnp.float32, minval=1.0, maxval=float(H * W))
        targets.append({"boxes": boxes, "area": area})

    out_images, out_targets = resize_forward(images, tuple(targets), OUTPUT_SIZE)

    jax.block_until_ready(out_images)
    for t in out_targets:
        jax.block_until_ready(t["boxes"])
        jax.block_until_ready(t["area"])

    # Shape checks
    assert out_images.shape == (B, C, OUTPUT_SIZE, OUTPUT_SIZE)
    assert out_targets[0]["boxes"].shape == (N_BOXES, 4)
    assert out_targets[0]["area"].shape == (N_BOXES,)

    # Numerical check against a pure-JAX f32 reference (bf16 MXU operands ->
    # loose tolerance).
    wh32 = jnp.asarray(aa_bilinear_weight_matrix(H, OUTPUT_SIZE))
    ww32 = jnp.asarray(aa_bilinear_weight_matrix(W, OUTPUT_SIZE))
    ref_images = jnp.einsum("oh,bchw,qw->bcoq", wh32, images, ww32)
    assert float(jnp.max(jnp.abs(out_images - ref_images))) < 5e-2

    factor = OUTPUT_SIZE / max(H, W)
    for b in range(B):
        assert jnp.allclose(out_targets[b]["boxes"], targets[b]["boxes"] * factor,
                            rtol=1e-6, atol=1e-5)
        assert jnp.allclose(out_targets[b]["area"], targets[b]["area"] * factor,
                            rtol=1e-6, atol=1e-5)

    print("KERNEL_OK")
</pallas_src>

<mosaic_0001>
module attributes {stable_mosaic.version = 11 : i64} {
  func.func @_resize_kernel(%arg0: i32, %arg1: memref<32x16xbf16, #tpu.memory_space<vmem>>, %arg2: memref<16x128xbf16, #tpu.memory_space<vmem>>, %arg3: memref<3x16x16xf32, #tpu.memory_space<vmem>>, %arg4: memref<3x32x128xf32, #tpu.memory_space<vmem>>, %arg5: memref<96x16xbf16, #tpu.memory_space<vmem>>) attributes {dimension_semantics = [#tpu.dimension_semantics<parallel>], iteration_bounds = array<i64: 2>, scalar_prefetch = 0 : i64, scratch_operands = 1 : i64, tpu.core_type = #tpu.core_type<tc>, window_params = [{pipeline_mode = #tpu.pipeline_mode<synchronous>, transform_indices = @transform_0, window_bounds = array<i64: 32, 16>}, {pipeline_mode = #tpu.pipeline_mode<synchronous>, transform_indices = @transform_1, window_bounds = array<i64: 16, 128>}, {transform_indices = @transform_2, window_bounds = array<i64: 3, 16, 16>}, {transform_indices = @transform_3, window_bounds = array<i64: 3, 32, 128>}]} {
    %c0 = arith.constant 0 : index
    %c0_0 = arith.constant 0 : index
    %0 = vector.load %arg1[%c0, %c0_0] : memref<32x16xbf16, #tpu.memory_space<vmem>>, vector<32x16xbf16>
    %c0_1 = arith.constant 0 : index
    %c0_2 = arith.constant 0 : index
    %c0_3 = arith.constant 0 : index
    %1 = vector.load %arg3[%c0_1, %c0_2, %c0_3] : memref<3x16x16xf32, #tpu.memory_space<vmem>>, vector<1x16x16xf32>
    %2 = vector.shape_cast %1 : vector<1x16x16xf32> to vector<16x16xf32>
    %3 = arith.truncf %2 : vector<16x16xf32> to vector<16x16xbf16>
    %cst = arith.constant dense<0.000000e+00> : vector<32x16xf32>
    %4 = tpu.matmul %0, %3, %cst {dimension_numbers = #tpu.dot_dimension_numbers<[1], [0], [0], [1], [0, 0, 1, 1], [], []>} : vector<32x16xbf16>, vector<16x16xbf16>, vector<32x16xf32> -> vector<32x16xf32>
    %5 = arith.truncf %4 : vector<32x16xf32> to vector<32x16xbf16>
    %c0_4 = arith.constant 0 : index
    %c0_5 = arith.constant 0 : index
    %6 = vector.load %arg5[%c0_4, %c0_5] : memref<96x16xbf16, #tpu.memory_space<vmem>>, vector<32x16xbf16>
    tpu.vector_store %arg5[%c0_4, %c0_5], %5 {strides = array<i32>} : memref<96x16xbf16, #tpu.memory_space<vmem>>, vector<32x16xbf16>,
    %c1 = arith.constant 1 : index
    %c0_6 = arith.constant 0 : index
    %c0_7 = arith.constant 0 : index
    %7 = vector.load %arg3[%c1, %c0_6, %c0_7] : memref<3x16x16xf32, #tpu.memory_space<vmem>>, vector<1x16x16xf32>
    %8 = vector.shape_cast %7 : vector<1x16x16xf32> to vector<16x16xf32>
    %9 = arith.truncf %8 : vector<16x16xf32> to vector<16x16xbf16>
    %cst_8 = arith.constant dense<0.000000e+00> : vector<32x16xf32>
    %10 = tpu.matmul %0, %9, %cst_8 {dimension_numbers = #tpu.dot_dimension_numbers<[1], [0], [0], [1], [0, 0, 1, 1], [], []>} : vector<32x16xbf16>, vector<16x16xbf16>, vector<32x16xf32> -> vector<32x16xf32>
    %11 = arith.truncf %10 : vector<32x16xf32> to vector<32x16xbf16>
    %c32 = arith.constant 32 : index
    %c0_9 = arith.constant 0 : index
    %12 = vector.load %arg5[%c32, %c0_9] : memref<96x16xbf16, #tpu.memory_space<vmem>>, vector<32x16xbf16>
    tpu.vector_store %arg5[%c32, %c0_9], %11 {strides = array<i32>} : memref<96x16xbf16, #tpu.memory_space<vmem>>, vector<32x16xbf16>,
    %c2 = arith.constant 2 : index
    %c0_10 = arith.constant 0 : index
    %c0_11 = arith.constant 0 : index
    %13 = vector.load %arg3[%c2, %c0_10, %c0_11] : memref<3x16x16xf32, #tpu.memory_space<vmem>>, vector<1x16x16xf32>
    %14 = vector.shape_cast %13 : vector<1x16x16xf32> to vector<16x16xf32>
    %15 = arith.truncf %14 : vector<16x16xf32> to vector<16x16xbf16>
    %cst_12 = arith.constant dense<0.000000e+00> : vector<32x16xf32>
    %16 = tpu.matmul %0, %15, %cst_12 {dimension_numbers = #tpu.dot_dimension_numbers<[1], [0], [0], [1], [0, 0, 1, 1], [], []>} : vector<32x16xbf16>, vector<16x16xbf16>, vector<32x16xf32> -> vector<32x16xf32>
    %17 = arith.truncf %16 : vector<32x16xf32> to vector<32x16xbf16>
    %c64 = arith.constant 64 : index
    %c0_13 = arith.constant 0 : index
    %18 = vector.load %arg5[%c64, %c0_13] : memref<96x16xbf16, #tpu.memory_space<vmem>>, vector<32x16xbf16>
    tpu.vector_store %arg5[%c64, %c0_13], %17 {strides = array<i32>} : memref<96x16xbf16, #tpu.memory_space<vmem>>, vector<32x16xbf16>,
    %c0_14 = arith.constant 0 : index
    %c0_15 = arith.constant 0 : index
    %19 = vector.load %arg5[%c0_14, %c0_15] : memref<96x16xbf16, #tpu.memory_space<vmem>>, vector<96x16xbf16>
    %c0_16 = arith.constant 0 : index
    %c0_17 = arith.constant 0 : index
    %20 = vector.load %arg2[%c0_16, %c0_17] : memref<16x128xbf16, #tpu.memory_space<vmem>>, vector<16x128xbf16>
    %cst_18 = arith.constant dense<0.000000e+00> : vector<96x128xf32>
    %21 = tpu.matmul %19, %20, %cst_18 {dimension_numbers = #tpu.dot_dimension_numbers<[1], [0], [0], [1], [0, 0, 1, 1], [], []>} : vector<96x16xbf16>, vector<16x128xbf16>, vector<96x128xf32> -> vector<96x128xf32>
    %22 = vector.extract_strided_slice %21 {offsets = [0, 0], sizes = [32, 128], strides = [1, 1]} : vector<96x128xf32> to vector<32x128xf32>
    %c0_19 = arith.constant 0 : index
    %c0_20 = arith.constant 0 : index
    %c0_21 = arith.constant 0 : index
    %23 = vector.load %arg4[%c0_19, %c0_20, %c0_21] : memref<3x32x128xf32, #tpu.memory_space<vmem>>, vector<1x32x128xf32>
    %24 = vector.shape_cast %23 : vector<1x32x128xf32> to vector<32x128xf32>
    %25 = vector.shape_cast %22 : vector<32x128xf32> to vector<1x32x128xf32>
    tpu.vector_store %arg4[%c0_19, %c0_20, %c0_21], %25 {strides = array<i32>} : memref<3x32x128xf32, #tpu.memory_space<vmem>>, vector<1x32x128xf32>,
    %26 = vector.extract_strided_slice %21 {offsets = [32, 0], sizes = [32, 128], strides = [1, 1]} : vector<96x128xf32> to vector<32x128xf32>
    %c1_22 = arith.constant 1 : index
    %c0_23 = arith.constant 0 : index
    %c0_24 = arith.constant 0 : index
    %27 = vector.load %arg4[%c1_22, %c0_23, %c0_24] : memref<3x32x128xf32, #tpu.memory_space<vmem>>, vector<1x32x128xf32>
    %28 = vector.shape_cast %27 : vector<1x32x128xf32> to vector<32x128xf32>
    %29 = vector.shape_cast %26 : vector<32x128xf32> to vector<1x32x128xf32>
    tpu.vector_store %arg4[%c1_22, %c0_23, %c0_24], %29 {strides = array<i32>} : memref<3x32x128xf32, #tpu.memory_space<vmem>>, vector<1x32x128xf32>,
    %30 = vector.extract_strided_slice %21 {offsets = [64, 0], sizes = [32, 128], strides = [1, 1]} : vector<96x128xf32> to vector<32x128xf32>
    %c2_25 = arith.constant 2 : index
    %c0_26 = arith.constant 0 : index
    %c0_27 = arith.constant 0 : index
    %31 = vector.load %arg4[%c2_25, %c0_26, %c0_27] : memref<3x32x128xf32, #tpu.memory_space<vmem>>, vector<1x32x128xf32>
    %32 = vector.shape_cast %31 : vector<1x32x128xf32> to vector<32x128xf32>
    %33 = vector.shape_cast %30 : vector<32x128xf32> to vector<1x32x128xf32>
    tpu.vector_store %arg4[%c2_25, %c0_26, %c0_27], %33 {strides = array<i32>} : memref<3x32x128xf32, #tpu.memory_space<vmem>>, vector<1x32x128xf32>,
    return
  }
  func.func @transform_0(%arg0: i32) -> (i32, i32) {
    %c0_i32 = arith.constant 0 : i32
    %c0_i32_0 = arith.constant 0 : i32
    %c0_i32_1 = arith.constant 0 : i32
    return %c0_i32, %c0_i32_0 : i32, i32
  }
  func.func @transform_1(%arg0: i32) -> (i32, i32) {
    %c0_i32 = arith.constant 0 : i32
    %c0_i32_0 = arith.constant 0 : i32
    %c0_i32_1 = arith.constant 0 : i32
    return %c0_i32, %c0_i32_0 : i32, i32
  }
  func.func @transform_2(%arg0: i32) -> (i32, i32, i32) {
    %c0_i32 = arith.constant 0 : i32
    %c0_i32_0 = arith.constant 0 : i32
    %c0_i32_1 = arith.constant 0 : i32
    return %arg0, %c0_i32, %c0_i32_0 : i32, i32, i32
  }
  func.func @transform_3(%arg0: i32) -> (i32, i32, i32) {
    %c0_i32 = arith.constant 0 : i32
    %c0_i32_0 = arith.constant 0 : i32
    %c0_i32_1 = arith.constant 0 : i32
    return %arg0, %c0_i32, %c0_i32_0 : i32, i32, i32
  }
}

module attributes {stable_mosaic.version = 11 : i64} {
  func.func @_resize_kernel(%arg0: i32, %arg1: memref<32x16xbf16, #tpu.memory_space<vmem>>, %arg2: memref<16x128xbf16, #tpu.memory_space<vmem>>, %arg3: memref<3x16x16xf32, #tpu.memory_space<vmem>>, %arg4: memref<3x32x128xf32, #tpu.memory_space<vmem>>, %arg5: memref<96x16xbf16, #tpu.memory_space<vmem>>) attributes {dimension_semantics = [#tpu.dimension_semantics<parallel>], iteration_bounds = array<i64: 2>, scalar_prefetch = 0 : i64, scratch_operands = 1 : i64, tpu.core_type = #tpu.core_type<tc>, window_params = [{pipeline_mode = #tpu.pipeline_mode<synchronous>, transform_indices = @transform_0, window_bounds = array<i64: 32, 16>}, {pipeline_mode = #tpu.pipeline_mode<synchronous>, transform_indices = @transform_1, window_bounds = array<i64: 16, 128>}, {transform_indices = @transform_2, window_bounds = array<i64: 3, 16, 16>}, {transform_indices = @transform_3, window_bounds = array<i64: 3, 32, 128>}]} {
    %c0 = arith.constant 0 : index
    %c0_0 = arith.constant 0 : index
    %0 = vector.load %arg1[%c0, %c0_0] : memref<32x16xbf16, #tpu.memory_space<vmem>>, vector<32x16xbf16>
    %c0_1 = arith.constant 0 : index
    %c0_2 = arith.constant 0 : index
    %c0_3 = arith.constant 0 : index
    %1 = vector.load %arg3[%c0_1, %c0_2, %c0_3] : memref<3x16x16xf32, #tpu.memory_space<vmem>>, vector<1x16x16xf32>
    %2 = vector.shape_cast %1 : vector<1x16x16xf32> to vector<16x16xf32>
    %3 = arith.truncf %2 : vector<16x16xf32> to vector<16x16xbf16>
    %cst = arith.constant dense<0.000000e+00> : vector<32x16xf32>
    %4 = tpu.matmul %0, %3, %cst {dimension_numbers = #tpu.dot_dimension_numbers<[1], [0], [0], [1], [0, 0, 1, 1], [], []>} : vector<32x16xbf16>, vector<16x16xbf16>, vector<32x16xf32> -> vector<32x16xf32>
    %5 = arith.truncf %4 : vector<32x16xf32> to vector<32x16xbf16>
    %c0_4 = arith.constant 0 : index
    %c0_5 = arith.constant 0 : index
    %6 = vector.load %arg5[%c0_4, %c0_5] : memref<96x16xbf16, #tpu.memory_space<vmem>>, vector<32x16xbf16>
    tpu.vector_store %arg5[%c0_4, %c0_5], %5 {strides = array<i32>} : memref<96x16xbf16, #tpu.memory_space<vmem>>, vector<32x16xbf16>,
    %c1 = arith.constant 1 : index
    %c0_6 = arith.constant 0 : index
    %c0_7 = arith.constant 0 : index
    %7 = vector.load %arg3[%c1, %c0_6, %c0_7] : memref<3x16x16xf32, #tpu.memory_space<vmem>>, vector<1x16x16xf32>
    %8 = vector.shape_cast %7 : vector<1x16x16xf32> to vector<16x16xf32>
    %9 = arith.truncf %8 : vector<16x16xf32> to vector<16x16xbf16>
    %cst_8 = arith.constant dense<0.000000e+00> : vector<32x16xf32>
    %10 = tpu.matmul %0, %9, %cst_8 {dimension_numbers = #tpu.dot_dimension_numbers<[1], [0], [0], [1], [0, 0, 1, 1], [], []>} : vector<32x16xbf16>, vector<16x16xbf16>, vector<32x16xf32> -> vector<32x16xf32>
    %11 = arith.truncf %10 : vector<32x16xf32> to vector<32x16xbf16>
    %c32 = arith.constant 32 : index
    %c0_9 = arith.constant 0 : index
    %12 = vector.load %arg5[%c32, %c0_9] : memref<96x16xbf16, #tpu.memory_space<vmem>>, vector<32x16xbf16>
    tpu.vector_store %arg5[%c32, %c0_9], %11 {strides = array<i32>} : memref<96x16xbf16, #tpu.memory_space<vmem>>, vector<32x16xbf16>,
    %c2 = arith.constant 2 : index
    %c0_10 = arith.constant 0 : index
    %c0_11 = arith.constant 0 : index
    %13 = vector.load %arg3[%c2, %c0_10, %c0_11] : memref<3x16x16xf32, #tpu.memory_space<vmem>>, vector<1x16x16xf32>
    %14 = vector.shape_cast %13 : vector<1x16x16xf32> to vector<16x16xf32>
    %15 = arith.truncf %14 : vector<16x16xf32> to vector<16x16xbf16>
    %cst_12 = arith.constant dense<0.000000e+00> : vector<32x16xf32>
    %16 = tpu.matmul %0, %15, %cst_12 {dimension_numbers = #tpu.dot_dimension_numbers<[1], [0], [0], [1], [0, 0, 1, 1], [], []>} : vector<32x16xbf16>, vector<16x16xbf16>, vector<32x16xf32> -> vector<32x16xf32>
    %17 = arith.truncf %16 : vector<32x16xf32> to vector<32x16xbf16>
    %c64 = arith.constant 64 : index
    %c0_13 = arith.constant 0 : index
    %18 = vector.load %arg5[%c64, %c0_13] : memref<96x16xbf16, #tpu.memory_space<vmem>>, vector<32x16xbf16>
    tpu.vector_store %arg5[%c64, %c0_13], %17 {strides = array<i32>} : memref<96x16xbf16, #tpu.memory_space<vmem>>, vector<32x16xbf16>,
    %c0_14 = arith.constant 0 : index
    %c0_15 = arith.constant 0 : index
    %19 = vector.load %arg5[%c0_14, %c0_15] : memref<96x16xbf16, #tpu.memory_space<vmem>>, vector<96x16xbf16>
    %c0_16 = arith.constant 0 : index
    %c0_17 = arith.constant 0 : index
    %20 = vector.load %arg2[%c0_16, %c0_17] : memref<16x128xbf16, #tpu.memory_space<vmem>>, vector<16x128xbf16>
    %cst_18 = arith.constant dense<0.000000e+00> : vector<96x128xf32>
    %21 = tpu.matmul %19, %20, %cst_18 {dimension_numbers = #tpu.dot_dimension_numbers<[1], [0], [0], [1], [0, 0, 1, 1], [], []>} : vector<96x16xbf16>, vector<16x128xbf16>, vector<96x128xf32> -> vector<96x128xf32>
    %22 = vector.extract_strided_slice %21 {offsets = [0, 0], sizes = [32, 128], strides = [1, 1]} : vector<96x128xf32> to vector<32x128xf32>
    %c0_19 = arith.constant 0 : index
    %c0_20 = arith.constant 0 : index
    %c0_21 = arith.constant 0 : index
    %23 = vector.load %arg4[%c0_19, %c0_20, %c0_21] : memref<3x32x128xf32, #tpu.memory_space<vmem>>, vector<1x32x128xf32>
    %24 = vector.shape_cast %23 : vector<1x32x128xf32> to vector<32x128xf32>
    %25 = vector.shape_cast %22 : vector<32x128xf32> to vector<1x32x128xf32>
    tpu.vector_store %arg4[%c0_19, %c0_20, %c0_21], %25 {strides = array<i32>} : memref<3x32x128xf32, #tpu.memory_space<vmem>>, vector<1x32x128xf32>,
    %26 = vector.extract_strided_slice %21 {offsets = [32, 0], sizes = [32, 128], strides = [1, 1]} : vector<96x128xf32> to vector<32x128xf32>
    %c1_22 = arith.constant 1 : index
    %c0_23 = arith.constant 0 : index
    %c0_24 = arith.constant 0 : index
    %27 = vector.load %arg4[%c1_22, %c0_23, %c0_24] : memref<3x32x128xf32, #tpu.memory_space<vmem>>, vector<1x32x128xf32>
    %28 = vector.shape_cast %27 : vector<1x32x128xf32> to vector<32x128xf32>
    %29 = vector.shape_cast %26 : vector<32x128xf32> to vector<1x32x128xf32>
    tpu.vector_store %arg4[%c1_22, %c0_23, %c0_24], %29 {strides = array<i32>} : memref<3x32x128xf32, #tpu.memory_space<vmem>>, vector<1x32x128xf32>,
    %30 = vector.extract_strided_slice %21 {offsets = [64, 0], sizes = [32, 128], strides = [1, 1]} : vector<96x128xf32> to vector<32x128xf32>
    %c2_25 = arith.constant 2 : index
    %c0_26 = arith.constant 0 : index
    %c0_27 = arith.constant 0 : index
    %31 = vector.load %arg4[%c2_25, %c0_26, %c0_27] : memref<3x32x128xf32, #tpu.memory_space<vmem>>, vector<1x32x128xf32>
    %32 = vector.shape_cast %31 : vector<1x32x128xf32> to vector<32x128xf32>
    %33 = vector.shape_cast %30 : vector<32x128xf32> to vector<1x32x128xf32>
    tpu.vector_store %arg4[%c2_25, %c0_26, %c0_27], %33 {strides = array<i32>} : memref<3x32x128xf32, #tpu.memory_space<vmem>>, vector<1x32x128xf32>,
    return
  }
  func.func @transform_0(%arg0: i32) -> (i32, i32) {
    %c0_i32 = arith.constant 0 : i32
    %c0_i32_0 = arith.constant 0 : i32
    %c0_i32_1 = arith.constant 0 : i32
    return %c0_i32, %c0_i32_0 : i32, i32
  }
  func.func @transform_1(%arg0: i32) -> (i32, i32) {
    %c0_i32 = arith.constant 0 : i32
    %c0_i32_0 = arith.constant 0 : i32
    %c0_i32_1 = arith.constant 0 : i32
    return %c0_i32, %c0_i32_0 : i32, i32
  }
  func.func @transform_2(%arg0: i32) -> (i32, i32, i32) {
    %c0_i32 = arith.constant 0 : i32
    %c0_i32_0 = arith.constant 0 : i32
    %c0_i32_1 = arith.constant 0 : i32
    return %arg0, %c0_i32, %c0_i32_0 : i32, i32, i32
  }
  func.func @transform_3(%arg0: i32) -> (i32, i32, i32) {
    %c0_i32 = arith.constant 0 : i32
    %c0_i32_0 = arith.constant 0 : i32
    %c0_i32_1 = arith.constant 0 : i32
    return %arg0, %c0_i32, %c0_i32_0 : i32, i32, i32
  }
}

</mosaic_0001>

<llo_original>
// kernel: tpu_custom_call.1
$region0: #{tpu_custom_call.1}
  #allocation0 [shape = 'u32[]', space=smem, size = 0x4, offset = 0x4, fixed_abs, tag = 'smem constant byte address 0x4 - core index']
  #allocation1 [shape = 'u32[72,128]{1,0:T(1,128)}', space=vmem, size = 0x9000, scoped, tag = 'internal scratch']
  #allocation2 [shape = 'bf16[96,16]{1,0:T(8,128)(2,1)}', space=vmem, size = 0x6000, scoped, tag = 'scratch operand']
  %s0 = inlined_call_operand.vmem [shape: bf16[32,16], index: 0, kind: input, shape index: {}]
  %s1 = inlined_call_operand.vmem [shape: bf16[16,128], index: 1, kind: input, shape index: {}]
  %s2 = inlined_call_operand.hbm [shape: f32[6,16,16], index: 2, kind: input, shape index: {}]
  %s3 = inlined_call_operand.hbm [shape: f32[6,32,128], index: 3, kind: output, shape index: {}]
  %s4 = sld [smem:[#allocation0]]
  $region49: #{tpu_custom_call.1} parent=0
    _
  %s6 = ssub.s32 1, %s4
  %s7 = scalar_select 0, %s6, %s4
  $region1: #{tpu_custom_call.1} parent=0
    #allocation3 [shape = 'u8[49152]{0}', space=vmem, size = 0xc000, scoped, tag = 'input window, operand 2']
    #allocation4 [shape = 's32[2]{0}', space=sflag, size = 0x8, scoped, tag = 'scoped memory for tpu_custom_call.1']
    #allocation5 [shape = 's32[2]{0}', space=sflag, size = 0x8, scoped, tag = 'scoped memory for tpu_custom_call.1']
    #allocation6 [shape = 'u8[98304]{0}', space=vmem, size = 0x18000, scoped, tag = 'output window, operand 0']
    %8 = vsyncpa [#allocation4], 0
    %s9 = scalar_lea.sflag [#allocation4], 1
    %10 = vsyncpa %s9, 0
    %11 = vsyncpa [#allocation5], 0
    %s12 = scalar_lea.sflag [#allocation5], 1
    %13 = vsyncpa %s12, 0
    loop: start=0, step=1, limit=4
    $region2: #{tpu_custom_call.1} parent=1 // loop_pre_header
      _
    $region3: #{tpu_custom_call.1} parent=1 // loop_header
      %s15 = sphi 0, %s19
      %p16 = scmp.ge.s32.totalorder %s15, 4
      %s23 = sphi 0, %s23
      %s25 = sphi 0, %s23
      %s26 = sphi 0, %s25
      %s40 = sphi 0, %s26
      %s44 = sphi 0, %s44
      %s46 = sphi 0, %s44
      %s47 = sphi 0, %s46
      %s61 = sphi 0, %s47
      %s67 = sphi 0, %s69
      %s70 = sphi 0, %s67
      %s71 = sphi 0, %s70
      %s87 = sphi 0, %s71
      %s93 = sphi 0, %s95
      %s96 = sphi 0, %s93
      %s97 = sphi 0, %s96
      %s113 = sphi 0, %s97
    $region4: #{tpu_custom_call.1} parent=1 // loop_header_branch
      %18 = sbr.rel (%p16) target = $region8
    $region5: #{tpu_custom_call.1} parent=1 // loop_body
      %s20 = ssub.s32 %s15, 1
      %s21 = ssub.s32 %s15, 2
      %s22 = sadd.s32 %s15, 1
      %s24 = sadd.s32 %s23, 1
      %p27 = scmp.eq.s32.totalorder %s15, 1
      %p28 = scmp.ne.s32.totalorder %s23, %s25
      %p29 = scmp.eq.s32.totalorder %s15, 0
      %p30 = por %p28, %p29
      %p31 = scmp.ne.s32.totalorder %s23, %s25
      %p32 = scmp.eq.s32.totalorder %s20, 1
      %p33 = por %p31, %p32
      %p34 = scmp.ne.s32.totalorder %s25, %s26
      %p35 = scmp.eq.s32.totalorder %s20, 0
      %p36 = por %p34, %p35
      %p37 = scmp.ne.s32.totalorder %s25, %s26
      %p38 = scmp.eq.s32.totalorder %s21, 1
      %p39 = por %p37, %p38
      %p41 = scmp.ne.s32.totalorder %s26, %s40
      %p42 = scmp.eq.s32.totalorder %s21, 0
      %p43 = por %p41, %p42
      %s45 = sadd.s32 %s44, 1
      %p48 = scmp.eq.s32.totalorder %s15, 1
      %p49 = scmp.ne.s32.totalorder %s44, %s46
      %p50 = scmp.eq.s32.totalorder %s15, 0
      %p51 = por %p49, %p50
      %p52 = scmp.ne.s32.totalorder %s44, %s46
      %p53 = scmp.eq.s32.totalorder %s20, 1
      %p54 = por %p52, %p53
      %p55 = scmp.ne.s32.totalorder %s46, %s47
      %p56 = scmp.eq.s32.totalorder %s20, 0
      %p57 = por %p55, %p56
      %p58 = scmp.ne.s32.totalorder %s46, %s47
      %p59 = scmp.eq.s32.totalorder %s21, 1
      %p60 = por %p58, %p59
      %p62 = scmp.ne.s32.totalorder %s47, %s61
      %p63 = scmp.eq.s32.totalorder %s21, 0
      %p64 = por %p62, %p63
      %s65 = ssub.s32 %s15, %s22
      %p66 = scmp.eq.s32.totalorder %s65, 0
      %s68 = sadd.s32 %s67, 1
      %s69 = scalar_select %p66, %s67, %s68
      %p72 = pneg %p66
      %p73 = scmp.eq.s32.totalorder %s15, 1
      %p74 = por %p72, %p73
      %p75 = scmp.ne.s32.totalorder %s67, %s70
      %p76 = scmp.eq.s32.totalorder %s15, 0
      %p77 = por %p75, %p76
      %p78 = scmp.ne.s32.totalorder %s67, %s70
      %p79 = scmp.eq.s32.totalorder %s20, 1
      %p80 = por %p78, %p79
      %p81 = scmp.ne.s32.totalorder %s70, %s71
      %p82 = scmp.eq.s32.totalorder %s20, 0
      %p83 = por %p81, %p82
      %p84 = scmp.ne.s32.totalorder %s70, %s71
      %p85 = scmp.eq.s32.totalorder %s21, 1
      %p86 = por %p84, %p85
      %p88 = scmp.ne.s32.totalorder %s71, %s87
      %p89 = scmp.eq.s32.totalorder %s21, 0
      %p90 = por %p88, %p89
      %s91 = ssub.s32 %s15, %s22
      %p92 = scmp.eq.s32.totalorder %s91, 0
      %s94 = sadd.s32 %s93, 1
      %s95 = scalar_select %p92, %s93, %s94
      %p98 = pneg %p92
      %p99 = scmp.eq.s32.totalorder %s15, 1
      %p100 = por %p98, %p99
      %p101 = scmp.ne.s32.totalorder %s93, %s96
      %p102 = scmp.eq.s32.totalorder %s15, 0
      %p103 = por %p101, %p102
      %p104 = scmp.ne.s32.totalorder %s93, %s96
      %p105 = scmp.eq.s32.totalorder %s20, 1
      %p106 = por %p104, %p105
      %p107 = scmp.ne.s32.totalorder %s96, %s97
      %p108 = scmp.eq.s32.totalorder %s20, 0
      %p109 = por %p107, %p108
      %p110 = scmp.ne.s32.totalorder %s96, %s97
      %p111 = scmp.eq.s32.totalorder %s21, 1
      %p112 = por %p110, %p111
      %p114 = scmp.ne.s32.totalorder %s97, %s113
      %p115 = scmp.eq.s32.totalorder %s21, 0
      %p116 = por %p114, %p115
      %p117 = scmp.le.s32.totalorder 1, %s15
      %p118 = scmp.lt.s32.totalorder %s15, 3
      %p119 = pnand %p117, %p118
      %p120 = pneg %p119
      // Predicated region
      $region9: #{tpu_custom_call.1} parent=5 // pred_check
        _
      $region10: #{tpu_custom_call.1} parent=5 // pred_check_branch
        %122 = sbr.rel (%p119) target = $region12
      $region11: #{tpu_custom_call.1} parent=5 // pred_region
        %s123 = ssub.s32 %s15, 1
        // Predicated region
        $region13: #{tpu_custom_call.1} parent=11 // pred_check
          %p124 = pneg %p36
        $region14: #{tpu_custom_call.1} parent=11 // pred_check_branch
          %126 = sbr.rel (%p124) target = $region16
        $region15: #{tpu_custom_call.1} parent=11 // pred_region
          _
        $region16: #{tpu_custom_call.1} parent=11 // pred_fallthru
          _
        // Predicated region
        $region17: #{tpu_custom_call.1} parent=11 // pred_check
          %p127 = pneg %p57
        $region18: #{tpu_custom_call.1} parent=11 // pred_check_branch
          %129 = sbr.rel (%p127) target = $region20
        $region19: #{tpu_custom_call.1} parent=11 // pred_region
          _
        $region20: #{tpu_custom_call.1} parent=11 // pred_fallthru
          _
      $region12: #{tpu_custom_call.1} parent=5 // pred_fallthru
        _
      %p130 = scmp.lt.s32.totalorder %s15, 2
      // Predicated region
      $region21: #{tpu_custom_call.1} parent=5 // pred_check
        %p131 = pneg %p130
      $region22: #{tpu_custom_call.1} parent=5 // pred_check_branch
        %133 = sbr.rel (%p131) target = $region24
      $region23: #{tpu_custom_call.1} parent=5 // pred_region
        // Predicated region
        $region25: #{tpu_custom_call.1} parent=23 // pred_check
          %p134 = pneg %p77
        $region26: #{tpu_custom_call.1} parent=23 // pred_check_branch
          %136 = sbr.rel (%p134) target = $region28
        $region27: #{tpu_custom_call.1} parent=23 // pred_region
          %s137 = sand.u32 %s67, 1
          %s138 = scalar_lea.sflag [#allocation4], %s137
          %s139 = sand.u32 %s67, 1
          %s140 = smul.addr %s139, 48
          %s141 = scalar_lea.vmem [#allocation3], %s140
          %s142 = smul.u32 3, %s15
          %144 = vsyncadd %s138, 0
          %s145 = smul.addr %s142, 2
          %s146 = smul.addr %s145, 8
          %s147 = scalar_lea.hbm %s2, %s146
          %s148 = sshll.u32 %s147, 4
          %s149 = int_to_ptr.hbm [resolvable:$true] %s148
          %s150 = sshll.u32 %s141, 4
          %s151 = int_to_ptr.vmem [resolvable:$true] %s150
          %156 = dma.hbm_to_vmem [thread:$0]  %s149, 768, %s151, %s138, 128, 128, 8
        $region28: #{tpu_custom_call.1} parent=23 // pred_fallthru
          _
      $region24: #{tpu_custom_call.1} parent=5 // pred_fallthru
        _
      %p157 = scmp.le.s32.totalorder 1, %s15
      %p158 = scmp.lt.s32.totalorder %s15, 3
      %p159 = pnand %p157, %p158
      %p160 = pneg %p159
      // Predicated region
      $region29: #{tpu_custom_call.1} parent=5 // pred_check
        _
      $region30: #{tpu_custom_call.1} parent=5 // pred_check_branch
        %162 = sbr.rel (%p159) target = $region32
      $region31: #{tpu_custom_call.1} parent=5 // pred_region
        %s163 = ssub.s32 %s15, 1
        %s164 = sand.u32 %s70, 1
        %s165 = scalar_lea.sflag [#allocation4], %s164
        %s166 = sand.u32 %s70, 1
        %s167 = smul.addr %s166, 48
        %s168 = scalar_lea.vmem [#allocation3], %s167
        // Predicated region
        $region33: #{tpu_custom_call.1} parent=31 // pred_check
          %p169 = pneg %p83
        $region34: #{tpu_custom_call.1} parent=31 // pred_check_branch
          %171 = sbr.rel (%p169) target = $region36
        $region35: #{tpu_custom_call.1} parent=31 // pred_region
          %173 = dma.done %s165, 768
        $region36: #{tpu_custom_call.1} parent=31 // pred_fallthru
          _
        %p174 = pneg %p36
        %p175 = pneg %p33
        %p176 = pneg %p57
        %p177 = pneg %p54
        %s178 = sand.u32 %s70, 1
        %s179 = scalar_lea.sflag [#allocation4], %s178
        %s180 = sand.u32 %s70, 1
        %s181 = smul.addr %s180, 48
        %s182 = scalar_lea.vmem [#allocation3], %s181
        %p183 = pneg %p83
        %p184 = pneg %p80
        %p185 = pneg %p109
        %p186 = pneg %p106
        %s187 = sand.u32 %s96, 1
        %s188 = scalar_lea.sflag [#allocation5], %s187
        %s189 = sand.u32 %s96, 1
        %s190 = smul.addr %s189, 96
        %s191 = scalar_lea.vmem [#allocation6], %s190
        %s192 = smul.u32 3, %s20
        %s193 = smul.u32 3, %s20
        %v195 = vld [vmem:[%s0] sm:$0xf]
        %v196 = vld [vmem:[%s0 + $0x4] sm:$0xf]
        %v197 = vld [vmem:[%s0 + $0x8] sm:$0xf]
        %v198 = vld [vmem:[%s0 + $0xc] sm:$0xf]
        %v199 = vld [vmem:[%s168] sm:$0xff]
        %v200 = vld [vmem:[%s168 + $0x8] sm:$0xff]
        %v201 = vpack.c.bf16 %v200, %v199
        %v206 = vunpack.c.l.b16 %v195
        %v207 = vunpack.c.l.b16 %v196
        %v208 = vunpack.c.l.b16 %v197
        %v209 = vunpack.c.l.b16 %v198
        %v210 = vpack.c.b16 %v207, %v206
        %v211 = vpack.c.b16 %v209, %v208
        %vm212 = vcmask 130048
        %v214 = vsel %vm212, %v210, 0
        %v217 = vsel %vm212, %v211, 0
        %219 = vmatpush.bf16.msra.mxu0 0
        %220 = vmatpush.bf16.msra.mxu0 0
        %221 = vmatpush.bf16.msra.mxu0 0
        %222 = vmatpush.bf16.msra.mxu0 0
        %223 = vmatpush.bf16.msra.mxu0 0
        %224 = vmatpush.bf16.msra.mxu0 0
        %225 = vmatpush.bf16.msra.mxu0 0
        %226 = vmatpush.bf16.msra.mxu0 %v201
        %227 = vmatmul.bf16.gmra.mxu0 %v214
        %v228 = vpop.f32.mrf.mxu0
        %v229 = vadd.f32 0.0, %v228
        %v230 = vpop.f32.mrf.mxu0
        %v231 = vadd.f32 0.0, %v230
        %232 = vmatmul.bf16.gmra.mxu0 %v217
        %v233 = vpop.f32.mrf.mxu0
        %v234 = vadd.f32 0.0, %v233
        %v235 = vpop.f32.mrf.mxu0
        %v236 = vadd.f32 0.0, %v235
        %237 = vdwg.mxu0
        %v238 = vpack.c.bf16 %v229, %v229
        %v239 = vpack.c.bf16 %v231, %v231
        %v240 = vpack.c.bf16 %v234, %v234
        %v241 = vpack.c.bf16 %v236, %v236
        %vm242 = vcmask 125952
        %243 = vst.msk [vmem:[#allocation2] sm:$0xf] %vm242, %v238
        %244 = vst.msk [vmem:[#allocation2 + $0x4] sm:$0xf] %vm242, %v239
        %245 = vst.msk [vmem:[#allocation2 + $0x8] sm:$0xf] %vm242, %v240
        %246 = vst.msk [vmem:[#allocation2 + $0xc] sm:$0xf] %vm242, %v241
        %s247 = scalar_lea.vmem %s168, 16 [#allocation3]
        %v248 = vld [vmem:[%s247] sm:$0xff]
        %v249 = vld [vmem:[%s247 + $0x8] sm:$0xff]
        %v250 = vpack.c.bf16 %v249, %v248
        %251 = vmatpush.bf16.msra.mxu0 0
        %252 = vmatpush.bf16.msra.mxu0 0
        %253 = vmatpush.bf16.msra.mxu0 0
        %254 = vmatpush.bf16.msra.mxu0 0
        %255 = vmatpush.bf16.msra.mxu0 0
        %256 = vmatpush.bf16.msra.mxu0 0
        %257 = vmatpush.bf16.msra.mxu0 0
        %258 = vmatpush.bf16.msra.mxu0 %v250
        %259 = vmatmul.bf16.gmra.mxu0 %v214
        %v260 = vpop.f32.mrf.mxu0
        %v261 = vadd.f32 0.0, %v260
        %v262 = vpop.f32.mrf.mxu0
        %v263 = vadd.f32 0.0, %v262
        %264 = vmatmul.bf16.gmra.mxu0 %v217
        %v265 = vpop.f32.mrf.mxu0
        %v266 = vadd.f32 0.0, %v265
        %v267 = vpop.f32.mrf.mxu0
        %v268 = vadd.f32 0.0, %v267
        %269 = vdwg.mxu0
        %v270 = vpack.c.bf16 %v261, %v261
        %v271 = vpack.c.bf16 %v263, %v263
        %v272 = vpack.c.bf16 %v266, %v266
        %v273 = vpack.c.bf16 %v268, %v268
        %274 = vst.msk [vmem:[#allocation2 + $0x10] sm:$0xf] %vm242, %v270
        %275 = vst.msk [vmem:[#allocation2 + $0x14] sm:$0xf] %vm242, %v271
        %276 = vst.msk [vmem:[#allocation2 + $0x18] sm:$0xf] %vm242, %v272
        %277 = vst.msk [vmem:[#allocation2 + $0x1c] sm:$0xf] %vm242, %v273
        %s278 = scalar_lea.vmem %s168, 32 [#allocation3]
        %v279 = vld [vmem:[%s278] sm:$0xff]
        %v280 = vld [vmem:[%s278 + $0x8] sm:$0xff]
        %v281 = vpack.c.bf16 %v280, %v279
        %282 = vmatpush.bf16.msra.mxu0 0
        %283 = vmatpush.bf16.msra.mxu0 0
        %284 = vmatpush.bf16.msra.mxu0 0
        %285 = vmatpush.bf16.msra.mxu0 0
        %286 = vmatpush.bf16.msra.mxu0 0
        %287 = vmatpush.bf16.msra.mxu0 0
        %288 = vmatpush.bf16.msra.mxu0 0
        %289 = vmatpush.bf16.msra.mxu0 %v281
        %290 = vmatmul.bf16.gmra.mxu0 %v214
        %v291 = vpop.f32.mrf.mxu0
        %v292 = vadd.f32 0.0, %v291
        %v293 = vpop.f32.mrf.mxu0
        %v294 = vadd.f32 0.0, %v293
        %295 = vmatmul.bf16.gmra.mxu0 %v217
        %v296 = vpop.f32.mrf.mxu0
        %v297 = vadd.f32 0.0, %v296
        %v298 = vpop.f32.mrf.mxu0
        %v299 = vadd.f32 0.0, %v298
        %300 = vdwg.mxu0
        %v301 = vpack.c.bf16 %v292, %v292
        %v302 = vpack.c.bf16 %v294, %v294
        %v303 = vpack.c.bf16 %v297, %v297
        %v304 = vpack.c.bf16 %v299, %v299
        %305 = vst.msk [vmem:[#allocation2 + $0x20] sm:$0xf] %vm242, %v301
        %306 = vst.msk [vmem:[#allocation2 + $0x24] sm:$0xf] %vm242, %v302
        %307 = vst.msk [vmem:[#allocation2 + $0x28] sm:$0xf] %vm242, %v303
        %308 = vst.msk [vmem:[#allocation2 + $0x2c] sm:$0xf] %vm242, %v304
        %v309 = vld [vmem:[#allocation2] sm:$0xf]
        %v310 = vld [vmem:[#allocation2 + $0x4] sm:$0xf]
        %v311 = vld [vmem:[#allocation2 + $0x8] sm:$0xf]
        %v312 = vld [vmem:[#allocation2 + $0xc] sm:$0xf]
        %v313 = vld [vmem:[#allocation2 + $0x10] sm:$0xf]
        %v314 = vld [vmem:[#allocation2 + $0x14] sm:$0xf]
        %v315 = vld [vmem:[#allocation2 + $0x18] sm:$0xf]
        %v316 = vld [vmem:[#allocation2 + $0x1c] sm:$0xf]
        %v317 = vld [vmem:[#allocation2 + $0x20] sm:$0xf]
        %v318 = vld [vmem:[#allocation2 + $0x24] sm:$0xf]
        %v319 = vld [vmem:[#allocation2 + $0x28] sm:$0xf]
        %v320 = vld [vmem:[#allocation2 + $0x2c] sm:$0xf]
        %v321 = vld [vmem:[%s1] sm:$0xf]
        %v322 = vld [vmem:[%s1 + $0x4] sm:$0xf]
        %v335 = vunpack.c.l.b16 %v309
        %v336 = vunpack.c.l.b16 %v310
        %v337 = vunpack.c.l.b16 %v311
        %v338 = vunpack.c.l.b16 %v312
        %v339 = vunpack.c.l.b16 %v313
        %v340 = vunpack.c.l.b16 %v314
        %v341 = vunpack.c.l.b16 %v315
        %v342 = vunpack.c.l.b16 %v316
        %v343 = vunpack.c.l.b16 %v317
        %v344 = vunpack.c.l.b16 %v318
        %v345 = vunpack.c.l.b16 %v319
        %v346 = vunpack.c.l.b16 %v320
        %v347 = vpack.c.b16 %v336, %v335
        %v348 = vpack.c.b16 %v338, %v337
        %v349 = vpack.c.b16 %v340, %v339
        %v350 = vpack.c.b16 %v342, %v341
        %v351 = vpack.c.b16 %v344, %v343
        %v352 = vpack.c.b16 %v346, %v345
        %v355 = vunpack.c.l.b16 %v321
        %v356 = vunpack.c.l.b16 %v322
        %v357 = vpack.c.b16 %v356, %v355
        %v360 = vsel %vm212, %v347, 0
        %v363 = vsel %vm212, %v348, 0
        %v366 = vsel %vm212, %v349, 0
        %v369 = vsel %vm212, %v350, 0
        %v372 = vsel %vm212, %v351, 0
        %v375 = vsel %vm212, %v352, 0
        %377 = vmatpush.bf16.msra.mxu0 0
        %378 = vmatpush.bf16.msra.mxu0 0
        %379 = vmatpush.bf16.msra.mxu0 0
        %380 = vmatpush.bf16.msra.mxu0 0
        %381 = vmatpush.bf16.msra.mxu0 0
        %382 = vmatpush.bf16.msra.mxu0 0
        %383 = vmatpush.bf16.msra.mxu0 0
        %384 = vmatpush.bf16.msra.mxu0 %v357
        %385 = vmatmul.bf16.gmra.mxu0 %v360
        %v386 = vpop.f32.mrf.mxu0
        %v387 = vadd.f32 0.0, %v386
        %v388 = vpop.f32.mrf.mxu0
        %v389 = vadd.f32 0.0, %v388
        %390 = vmatmul.bf16.gmra.mxu0 %v363
        %v391 = vpop.f32.mrf.mxu0
        %v392 = vadd.f32 0.0, %v391
        %v393 = vpop.f32.mrf.mxu0
        %v394 = vadd.f32 0.0, %v393
        %395 = vmatmul.bf16.gmra.mxu0 %v366
        %v396 = vpop.f32.mrf.mxu0
        %v397 = vadd.f32 0.0, %v396
        %v398 = vpop.f32.mrf.mxu0
        %v399 = vadd.f32 0.0, %v398
        %400 = vmatmul.bf16.gmra.mxu0 %v369
        %v401 = vpop.f32.mrf.mxu0
        %v402 = vadd.f32 0.0, %v401
        %v403 = vpop.f32.mrf.mxu0
        %v404 = vadd.f32 0.0, %v403
        %405 = vmatmul.bf16.gmra.mxu0 %v372
        %v406 = vpop.f32.mrf.mxu0
        %v407 = vadd.f32 0.0, %v406
        %v408 = vpop.f32.mrf.mxu0
        %v409 = vadd.f32 0.0, %v408
        %410 = vmatmul.bf16.gmra.mxu0 %v375
        %v411 = vpop.f32.mrf.mxu0
        %v412 = vadd.f32 0.0, %v411
        %v413 = vpop.f32.mrf.mxu0
        %v414 = vadd.f32 0.0, %v413
        %415 = vdwg.mxu0
        %416 = vst [vmem:[%s191] sm:$0xff] %v387
        %417 = vst [vmem:[%s191 + $0x8] sm:$0xff] %v389
        %418 = vst [vmem:[%s191 + $0x10] sm:$0xff] %v392
        %419 = vst [vmem:[%s191 + $0x18] sm:$0xff] %v394
        %s420 = scalar_lea.vmem %s191, 32 [#allocation6]
        %421 = vst [vmem:[%s420] sm:$0xff] %v397
        %422 = vst [vmem:[%s420 + $0x8] sm:$0xff] %v399
        %423 = vst [vmem:[%s420 + $0x10] sm:$0xff] %v402
        %424 = vst [vmem:[%s420 + $0x18] sm:$0xff] %v404
        %s425 = scalar_lea.vmem %s191, 64 [#allocation6]
        %426 = vst [vmem:[%s425] sm:$0xff] %v407
        %427 = vst [vmem:[%s425 + $0x8] sm:$0xff] %v409
        %428 = vst [vmem:[%s425 + $0x10] sm:$0xff] %v412
        %429 = vst [vmem:[%s425 + $0x18] sm:$0xff] %v414
        %s430 = sand.u32 %s96, 1
        %s431 = scalar_lea.sflag [#allocation5], %s430
        %s432 = sand.u32 %s96, 1
        %s433 = smul.addr %s432, 96
        %s434 = scalar_lea.vmem [#allocation6], %s433
        // Predicated region
        $region37: #{tpu_custom_call.1} parent=31 // pred_check
          %p435 = pneg %p106
        $region38: #{tpu_custom_call.1} parent=31 // pred_check_branch
          %437 = sbr.rel (%p435) target = $region40
        $region39: #{tpu_custom_call.1} parent=31 // pred_region
          %s438 = smul.u32 3, %s20
          %440 = vsyncadd %s431, 0
          %s441 = smul.addr %s438, 4
          %s442 = smul.addr %s441, 8
          %s443 = scalar_lea.hbm %s3, %s442
          %s444 = sshll.u32 %s434, 4
          %s445 = int_to_ptr.vmem [resolvable:$true] %s444
          %s446 = sshll.u32 %s443, 4
          %s447 = int_to_ptr.hbm [resolvable:$true] %s446
          %452 = dma.vmem_to_hbm [thread:$0]  %s445, 1536, %s447, %s431, 128, 128, 8
        $region40: #{tpu_custom_call.1} parent=31 // pred_fallthru
          _
      $region32: #{tpu_custom_call.1} parent=5 // pred_fallthru
        _
      %p453 = scmp.le.s32.totalorder 2, %s15
      // Predicated region
      $region41: #{tpu_custom_call.1} parent=5 // pred_check
        %p454 = pneg %p453
      $region42: #{tpu_custom_call.1} parent=5 // pred_check_branch
        %456 = sbr.rel (%p454) target = $region44
      $region43: #{tpu_custom_call.1} parent=5 // pred_region
        %s457 = ssub.s32 %s15, 2
        // Predicated region
        $region45: #{tpu_custom_call.1} parent=43 // pred_check
          %p458 = pneg %p112
        $region46: #{tpu_custom_call.1} parent=43 // pred_check_branch
          %460 = sbr.rel (%p458) target = $region48
        $region47: #{tpu_custom_call.1} parent=43 // pred_region
          %s461 = sand.u32 %s97, 1
          %s462 = scalar_lea.sflag [#allocation5], %s461
          %s463 = sand.u32 %s97, 1
          %s464 = smul.addr %s463, 96
          %s465 = scalar_lea.vmem [#allocation6], %s464
          %467 = dma.done %s462, 1536
        $region48: #{tpu_custom_call.1} parent=43 // pred_fallthru
          _
      $region44: #{tpu_custom_call.1} parent=5 // pred_fallthru
        _
    $region6: #{tpu_custom_call.1} parent=1 // loop_footer
      %s19 = sadd.s32 1, %s15
    $region7: #{tpu_custom_call.1} parent=1 // loop_footer_branch
      %14 = sbr.rel target = $region3
    $region8: #{tpu_custom_call.1} parent=1 // loop_exit
      _
    %468 = vsyncpa [#allocation4], 1
    %s469 = scalar_lea.sflag [#allocation4], 1
    %470 = vsyncpa %s469, 1
    %471 = vsyncpa [#allocation5], 1
    %s472 = scalar_lea.sflag [#allocation5], 1
    %473 = vsyncpa %s472, 1

// kernel: tpu_custom_call.1
$region0: #{tpu_custom_call.1}
  #allocation0 [shape = 'u32[]', space=smem, size = 0x4, offset = 0x4, fixed_abs, tag = 'smem constant byte address 0x4 - core index']
  #allocation1 [shape = 'u32[72,128]{1,0:T(1,128)}', space=vmem, size = 0x9000, scoped, tag = 'internal scratch']
  #allocation2 [shape = 'bf16[96,16]{1,0:T(8,128)(2,1)}', space=vmem, size = 0x6000, scoped, tag = 'scratch operand']
  %s0 = inlined_call_operand.vmem [shape: bf16[32,16], index: 0, kind: input, shape index: {}]
  %s1 = inlined_call_operand.vmem [shape: bf16[16,128], index: 1, kind: input, shape index: {}]
  %s2 = inlined_call_operand.hbm [shape: f32[6,16,16], index: 2, kind: input, shape index: {}]
  %s3 = inlined_call_operand.hbm [shape: f32[6,32,128], index: 3, kind: output, shape index: {}]
  %s4 = sld [smem:[#allocation0]]
  $region49: #{tpu_custom_call.1} parent=0
    _
  %s6 = ssub.s32 1, %s4
  %s7 = scalar_select 0, %s6, %s4
  $region1: #{tpu_custom_call.1} parent=0
    #allocation3 [shape = 'u8[49152]{0}', space=vmem, size = 0xc000, scoped, tag = 'input window, operand 2']
    #allocation4 [shape = 's32[2]{0}', space=sflag, size = 0x8, scoped, tag = 'scoped memory for tpu_custom_call.1']
    #allocation5 [shape = 's32[2]{0}', space=sflag, size = 0x8, scoped, tag = 'scoped memory for tpu_custom_call.1']
    #allocation6 [shape = 'u8[98304]{0}', space=vmem, size = 0x18000, scoped, tag = 'output window, operand 0']
    %8 = vsyncpa [#allocation4], 0
    %s9 = scalar_lea.sflag [#allocation4], 1
    %10 = vsyncpa %s9, 0
    %11 = vsyncpa [#allocation5], 0
    %s12 = scalar_lea.sflag [#allocation5], 1
    %13 = vsyncpa %s12, 0
    loop: start=0, step=1, limit=4
    $region2: #{tpu_custom_call.1} parent=1 // loop_pre_header
      _
    $region3: #{tpu_custom_call.1} parent=1 // loop_header
      %s15 = sphi 0, %s19
      %p16 = scmp.ge.s32.totalorder %s15, 4
      %s23 = sphi 0, %s23
      %s25 = sphi 0, %s23
      %s26 = sphi 0, %s25
      %s40 = sphi 0, %s26
      %s44 = sphi 0, %s44
      %s46 = sphi 0, %s44
      %s47 = sphi 0, %s46
      %s61 = sphi 0, %s47
      %s67 = sphi 0, %s69
      %s70 = sphi 0, %s67
      %s71 = sphi 0, %s70
      %s87 = sphi 0, %s71
      %s93 = sphi 0, %s95
      %s96 = sphi 0, %s93
      %s97 = sphi 0, %s96
      %s113 = sphi 0, %s97
    $region4: #{tpu_custom_call.1} parent=1 // loop_header_branch
      %18 = sbr.rel (%p16) target = $region8
    $region5: #{tpu_custom_call.1} parent=1 // loop_body
      %s20 = ssub.s32 %s15, 1
      %s21 = ssub.s32 %s15, 2
      %s22 = sadd.s32 %s15, 1
      %s24 = sadd.s32 %s23, 1
      %p27 = scmp.eq.s32.totalorder %s15, 1
      %p28 = scmp.ne.s32.totalorder %s23, %s25
      %p29 = scmp.eq.s32.totalorder %s15, 0
      %p30 = por %p28, %p29
      %p31 = scmp.ne.s32.totalorder %s23, %s25
      %p32 = scmp.eq.s32.totalorder %s20, 1
      %p33 = por %p31, %p32
      %p34 = scmp.ne.s32.totalorder %s25, %s26
      %p35 = scmp.eq.s32.totalorder %s20, 0
      %p36 = por %p34, %p35
      %p37 = scmp.ne.s32.totalorder %s25, %s26
      %p38 = scmp.eq.s32.totalorder %s21, 1
      %p39 = por %p37, %p38
      %p41 = scmp.ne.s32.totalorder %s26, %s40
      %p42 = scmp.eq.s32.totalorder %s21, 0
      %p43 = por %p41, %p42
      %s45 = sadd.s32 %s44, 1
      %p48 = scmp.eq.s32.totalorder %s15, 1
      %p49 = scmp.ne.s32.totalorder %s44, %s46
      %p50 = scmp.eq.s32.totalorder %s15, 0
      %p51 = por %p49, %p50
      %p52 = scmp.ne.s32.totalorder %s44, %s46
      %p53 = scmp.eq.s32.totalorder %s20, 1
      %p54 = por %p52, %p53
      %p55 = scmp.ne.s32.totalorder %s46, %s47
      %p56 = scmp.eq.s32.totalorder %s20, 0
      %p57 = por %p55, %p56
      %p58 = scmp.ne.s32.totalorder %s46, %s47
      %p59 = scmp.eq.s32.totalorder %s21, 1
      %p60 = por %p58, %p59
      %p62 = scmp.ne.s32.totalorder %s47, %s61
      %p63 = scmp.eq.s32.totalorder %s21, 0
      %p64 = por %p62, %p63
      %s65 = ssub.s32 %s15, %s22
      %p66 = scmp.eq.s32.totalorder %s65, 0
      %s68 = sadd.s32 %s67, 1
      %s69 = scalar_select %p66, %s67, %s68
      %p72 = pneg %p66
      %p73 = scmp.eq.s32.totalorder %s15, 1
      %p74 = por %p72, %p73
      %p75 = scmp.ne.s32.totalorder %s67, %s70
      %p76 = scmp.eq.s32.totalorder %s15, 0
      %p77 = por %p75, %p76
      %p78 = scmp.ne.s32.totalorder %s67, %s70
      %p79 = scmp.eq.s32.totalorder %s20, 1
      %p80 = por %p78, %p79
      %p81 = scmp.ne.s32.totalorder %s70, %s71
      %p82 = scmp.eq.s32.totalorder %s20, 0
      %p83 = por %p81, %p82
      %p84 = scmp.ne.s32.totalorder %s70, %s71
      %p85 = scmp.eq.s32.totalorder %s21, 1
      %p86 = por %p84, %p85
      %p88 = scmp.ne.s32.totalorder %s71, %s87
      %p89 = scmp.eq.s32.totalorder %s21, 0
      %p90 = por %p88, %p89
      %s91 = ssub.s32 %s15, %s22
      %p92 = scmp.eq.s32.totalorder %s91, 0
      %s94 = sadd.s32 %s93, 1
      %s95 = scalar_select %p92, %s93, %s94
      %p98 = pneg %p92
      %p99 = scmp.eq.s32.totalorder %s15, 1
      %p100 = por %p98, %p99
      %p101 = scmp.ne.s32.totalorder %s93, %s96
      %p102 = scmp.eq.s32.totalorder %s15, 0
      %p103 = por %p101, %p102
      %p104 = scmp.ne.s32.totalorder %s93, %s96
      %p105 = scmp.eq.s32.totalorder %s20, 1
      %p106 = por %p104, %p105
      %p107 = scmp.ne.s32.totalorder %s96, %s97
      %p108 = scmp.eq.s32.totalorder %s20, 0
      %p109 = por %p107, %p108
      %p110 = scmp.ne.s32.totalorder %s96, %s97
      %p111 = scmp.eq.s32.totalorder %s21, 1
      %p112 = por %p110, %p111
      %p114 = scmp.ne.s32.totalorder %s97, %s113
      %p115 = scmp.eq.s32.totalorder %s21, 0
      %p116 = por %p114, %p115
      %p117 = scmp.le.s32.totalorder 1, %s15
      %p118 = scmp.lt.s32.totalorder %s15, 3
      %p119 = pnand %p117, %p118
      %p120 = pneg %p119
      // Predicated region
      $region9: #{tpu_custom_call.1} parent=5 // pred_check
        _
      $region10: #{tpu_custom_call.1} parent=5 // pred_check_branch
        %122 = sbr.rel (%p119) target = $region12
      $region11: #{tpu_custom_call.1} parent=5 // pred_region
        %s123 = ssub.s32 %s15, 1
        // Predicated region
        $region13: #{tpu_custom_call.1} parent=11 // pred_check
          %p124 = pneg %p36
        $region14: #{tpu_custom_call.1} parent=11 // pred_check_branch
          %126 = sbr.rel (%p124) target = $region16
        $region15: #{tpu_custom_call.1} parent=11 // pred_region
          _
        $region16: #{tpu_custom_call.1} parent=11 // pred_fallthru
          _
        // Predicated region
        $region17: #{tpu_custom_call.1} parent=11 // pred_check
          %p127 = pneg %p57
        $region18: #{tpu_custom_call.1} parent=11 // pred_check_branch
          %129 = sbr.rel (%p127) target = $region20
        $region19: #{tpu_custom_call.1} parent=11 // pred_region
          _
        $region20: #{tpu_custom_call.1} parent=11 // pred_fallthru
          _
      $region12: #{tpu_custom_call.1} parent=5 // pred_fallthru
        _
      %p130 = scmp.lt.s32.totalorder %s15, 2
      // Predicated region
      $region21: #{tpu_custom_call.1} parent=5 // pred_check
        %p131 = pneg %p130
      $region22: #{tpu_custom_call.1} parent=5 // pred_check_branch
        %133 = sbr.rel (%p131) target = $region24
      $region23: #{tpu_custom_call.1} parent=5 // pred_region
        // Predicated region
        $region25: #{tpu_custom_call.1} parent=23 // pred_check
          %p134 = pneg %p77
        $region26: #{tpu_custom_call.1} parent=23 // pred_check_branch
          %136 = sbr.rel (%p134) target = $region28
        $region27: #{tpu_custom_call.1} parent=23 // pred_region
          %s137 = sand.u32 %s67, 1
          %s138 = scalar_lea.sflag [#allocation4], %s137
          %s139 = sand.u32 %s67, 1
          %s140 = smul.addr %s139, 48
          %s141 = scalar_lea.vmem [#allocation3], %s140
          %s142 = smul.u32 3, %s15
          %144 = vsyncadd %s138, 0
          %s145 = smul.addr %s142, 2
          %s146 = smul.addr %s145, 8
          %s147 = scalar_lea.hbm %s2, %s146
          %s148 = sshll.u32 %s147, 4
          %s149 = int_to_ptr.hbm [resolvable:$true] %s148
          %s150 = sshll.u32 %s141, 4
          %s151 = int_to_ptr.vmem [resolvable:$true] %s150
          %156 = dma.hbm_to_vmem [thread:$0]  %s149, 768, %s151, %s138, 128, 128, 8
        $region28: #{tpu_custom_call.1} parent=23 // pred_fallthru
          _
      $region24: #{tpu_custom_call.1} parent=5 // pred_fallthru
        _
      %p157 = scmp.le.s32.totalorder 1, %s15
      %p158 = scmp.lt.s32.totalorder %s15, 3
      %p159 = pnand %p157, %p158
      %p160 = pneg %p159
      // Predicated region
      $region29: #{tpu_custom_call.1} parent=5 // pred_check
        _
      $region30: #{tpu_custom_call.1} parent=5 // pred_check_branch
        %162 = sbr.rel (%p159) target = $region32
      $region31: #{tpu_custom_call.1} parent=5 // pred_region
        %s163 = ssub.s32 %s15, 1
        %s164 = sand.u32 %s70, 1
        %s165 = scalar_lea.sflag [#allocation4], %s164
        %s166 = sand.u32 %s70, 1
        %s167 = smul.addr %s166, 48
        %s168 = scalar_lea.vmem [#allocation3], %s167
        // Predicated region
        $region33: #{tpu_custom_call.1} parent=31 // pred_check
          %p169 = pneg %p83
        $region34: #{tpu_custom_call.1} parent=31 // pred_check_branch
          %171 = sbr.rel (%p169) target = $region36
        $region35: #{tpu_custom_call.1} parent=31 // pred_region
          %173 = dma.done %s165, 768
        $region36: #{tpu_custom_call.1} parent=31 // pred_fallthru
          _
        %p174 = pneg %p36
        %p175 = pneg %p33
        %p176 = pneg %p57
        %p177 = pneg %p54
        %s178 = sand.u32 %s70, 1
        %s179 = scalar_lea.sflag [#allocation4], %s178
        %s180 = sand.u32 %s70, 1
        %s181 = smul.addr %s180, 48
        %s182 = scalar_lea.vmem [#allocation3], %s181
        %p183 = pneg %p83
        %p184 = pneg %p80
        %p185 = pneg %p109
        %p186 = pneg %p106
        %s187 = sand.u32 %s96, 1
        %s188 = scalar_lea.sflag [#allocation5], %s187
        %s189 = sand.u32 %s96, 1
        %s190 = smul.addr %s189, 96
        %s191 = scalar_lea.vmem [#allocation6], %s190
        %s192 = smul.u32 3, %s20
        %s193 = smul.u32 3, %s20
        %v195 = vld [vmem:[%s0] sm:$0xf]
        %v196 = vld [vmem:[%s0 + $0x4] sm:$0xf]
        %v197 = vld [vmem:[%s0 + $0x8] sm:$0xf]
        %v198 = vld [vmem:[%s0 + $0xc] sm:$0xf]
        %v199 = vld [vmem:[%s168] sm:$0xff]
        %v200 = vld [vmem:[%s168 + $0x8] sm:$0xff]
        %v201 = vpack.c.bf16 %v200, %v199
        %v206 = vunpack.c.l.b16 %v195
        %v207 = vunpack.c.l.b16 %v196
        %v208 = vunpack.c.l.b16 %v197
        %v209 = vunpack.c.l.b16 %v198
        %v210 = vpack.c.b16 %v207, %v206
        %v211 = vpack.c.b16 %v209, %v208
        %vm212 = vcmask 130048
        %v214 = vsel %vm212, %v210, 0
        %v217 = vsel %vm212, %v211, 0
        %219 = vmatpush.bf16.msra.mxu0 0
        %220 = vmatpush.bf16.msra.mxu0 0
        %221 = vmatpush.bf16.msra.mxu0 0
        %222 = vmatpush.bf16.msra.mxu0 0
        %223 = vmatpush.bf16.msra.mxu0 0
        %224 = vmatpush.bf16.msra.mxu0 0
        %225 = vmatpush.bf16.msra.mxu0 0
        %226 = vmatpush.bf16.msra.mxu0 %v201
        %227 = vmatmul.bf16.gmra.mxu0 %v214
        %v228 = vpop.f32.mrf.mxu0
        %v229 = vadd.f32 0.0, %v228
        %v230 = vpop.f32.mrf.mxu0
        %v231 = vadd.f32 0.0, %v230
        %232 = vmatmul.bf16.gmra.mxu0 %v217
        %v233 = vpop.f32.mrf.mxu0
        %v234 = vadd.f32 0.0, %v233
        %v235 = vpop.f32.mrf.mxu0
        %v236 = vadd.f32 0.0, %v235
        %237 = vdwg.mxu0
        %v238 = vpack.c.bf16 %v229, %v229
        %v239 = vpack.c.bf16 %v231, %v231
        %v240 = vpack.c.bf16 %v234, %v234
        %v241 = vpack.c.bf16 %v236, %v236
        %vm242 = vcmask 125952
        %243 = vst.msk [vmem:[#allocation2] sm:$0xf] %vm242, %v238
        %244 = vst.msk [vmem:[#allocation2 + $0x4] sm:$0xf] %vm242, %v239
        %245 = vst.msk [vmem:[#allocation2 + $0x8] sm:$0xf] %vm242, %v240
        %246 = vst.msk [vmem:[#allocation2 + $0xc] sm:$0xf] %vm242, %v241
        %s247 = scalar_lea.vmem %s168, 16 [#allocation3]
        %v248 = vld [vmem:[%s247] sm:$0xff]
        %v249 = vld [vmem:[%s247 + $0x8] sm:$0xff]
        %v250 = vpack.c.bf16 %v249, %v248
        %251 = vmatpush.bf16.msra.mxu0 0
        %252 = vmatpush.bf16.msra.mxu0 0
        %253 = vmatpush.bf16.msra.mxu0 0
        %254 = vmatpush.bf16.msra.mxu0 0
        %255 = vmatpush.bf16.msra.mxu0 0
        %256 = vmatpush.bf16.msra.mxu0 0
        %257 = vmatpush.bf16.msra.mxu0 0
        %258 = vmatpush.bf16.msra.mxu0 %v250
        %259 = vmatmul.bf16.gmra.mxu0 %v214
        %v260 = vpop.f32.mrf.mxu0
        %v261 = vadd.f32 0.0, %v260
        %v262 = vpop.f32.mrf.mxu0
        %v263 = vadd.f32 0.0, %v262
        %264 = vmatmul.bf16.gmra.mxu0 %v217
        %v265 = vpop.f32.mrf.mxu0
        %v266 = vadd.f32 0.0, %v265
        %v267 = vpop.f32.mrf.mxu0
        %v268 = vadd.f32 0.0, %v267
        %269 = vdwg.mxu0
        %v270 = vpack.c.bf16 %v261, %v261
        %v271 = vpack.c.bf16 %v263, %v263
        %v272 = vpack.c.bf16 %v266, %v266
        %v273 = vpack.c.bf16 %v268, %v268
        %274 = vst.msk [vmem:[#allocation2 + $0x10] sm:$0xf] %vm242, %v270
        %275 = vst.msk [vmem:[#allocation2 + $0x14] sm:$0xf] %vm242, %v271
        %276 = vst.msk [vmem:[#allocation2 + $0x18] sm:$0xf] %vm242, %v272
        %277 = vst.msk [vmem:[#allocation2 + $0x1c] sm:$0xf] %vm242, %v273
        %s278 = scalar_lea.vmem %s168, 32 [#allocation3]
        %v279 = vld [vmem:[%s278] sm:$0xff]
        %v280 = vld [vmem:[%s278 + $0x8] sm:$0xff]
        %v281 = vpack.c.bf16 %v280, %v279
        %282 = vmatpush.bf16.msra.mxu0 0
        %283 = vmatpush.bf16.msra.mxu0 0
        %284 = vmatpush.bf16.msra.mxu0 0
        %285 = vmatpush.bf16.msra.mxu0 0
        %286 = vmatpush.bf16.msra.mxu0 0
        %287 = vmatpush.bf16.msra.mxu0 0
        %288 = vmatpush.bf16.msra.mxu0 0
        %289 = vmatpush.bf16.msra.mxu0 %v281
        %290 = vmatmul.bf16.gmra.mxu0 %v214
        %v291 = vpop.f32.mrf.mxu0
        %v292 = vadd.f32 0.0, %v291
        %v293 = vpop.f32.mrf.mxu0
        %v294 = vadd.f32 0.0, %v293
        %295 = vmatmul.bf16.gmra.mxu0 %v217
        %v296 = vpop.f32.mrf.mxu0
        %v297 = vadd.f32 0.0, %v296
        %v298 = vpop.f32.mrf.mxu0
        %v299 = vadd.f32 0.0, %v298
        %300 = vdwg.mxu0
        %v301 = vpack.c.bf16 %v292, %v292
        %v302 = vpack.c.bf16 %v294, %v294
        %v303 = vpack.c.bf16 %v297, %v297
        %v304 = vpack.c.bf16 %v299, %v299
        %305 = vst.msk [vmem:[#allocation2 + $0x20] sm:$0xf] %vm242, %v301
        %306 = vst.msk [vmem:[#allocation2 + $0x24] sm:$0xf] %vm242, %v302
        %307 = vst.msk [vmem:[#allocation2 + $0x28] sm:$0xf] %vm242, %v303
        %308 = vst.msk [vmem:[#allocation2 + $0x2c] sm:$0xf] %vm242, %v304
        %v309 = vld [vmem:[#allocation2] sm:$0xf]
        %v310 = vld [vmem:[#allocation2 + $0x4] sm:$0xf]
        %v311 = vld [vmem:[#allocation2 + $0x8] sm:$0xf]
        %v312 = vld [vmem:[#allocation2 + $0xc] sm:$0xf]
        %v313 = vld [vmem:[#allocation2 + $0x10] sm:$0xf]
        %v314 = vld [vmem:[#allocation2 + $0x14] sm:$0xf]
        %v315 = vld [vmem:[#allocation2 + $0x18] sm:$0xf]
        %v316 = vld [vmem:[#allocation2 + $0x1c] sm:$0xf]
        %v317 = vld [vmem:[#allocation2 + $0x20] sm:$0xf]
        %v318 = vld [vmem:[#allocation2 + $0x24] sm:$0xf]
        %v319 = vld [vmem:[#allocation2 + $0x28] sm:$0xf]
        %v320 = vld [vmem:[#allocation2 + $0x2c] sm:$0xf]
        %v321 = vld [vmem:[%s1] sm:$0xf]
        %v322 = vld [vmem:[%s1 + $0x4] sm:$0xf]
        %v335 = vunpack.c.l.b16 %v309
        %v336 = vunpack.c.l.b16 %v310
        %v337 = vunpack.c.l.b16 %v311
        %v338 = vunpack.c.l.b16 %v312
        %v339 = vunpack.c.l.b16 %v313
        %v340 = vunpack.c.l.b16 %v314
        %v341 = vunpack.c.l.b16 %v315
        %v342 = vunpack.c.l.b16 %v316
        %v343 = vunpack.c.l.b16 %v317
        %v344 = vunpack.c.l.b16 %v318
        %v345 = vunpack.c.l.b16 %v319
        %v346 = vunpack.c.l.b16 %v320
        %v347 = vpack.c.b16 %v336, %v335
        %v348 = vpack.c.b16 %v338, %v337
        %v349 = vpack.c.b16 %v340, %v339
        %v350 = vpack.c.b16 %v342, %v341
        %v351 = vpack.c.b16 %v344, %v343
        %v352 = vpack.c.b16 %v346, %v345
        %v355 = vunpack.c.l.b16 %v321
        %v356 = vunpack.c.l.b16 %v322
        %v357 = vpack.c.b16 %v356, %v355
        %v360 = vsel %vm212, %v347, 0
        %v363 = vsel %vm212, %v348, 0
        %v366 = vsel %vm212, %v349, 0
        %v369 = vsel %vm212, %v350, 0
        %v372 = vsel %vm212, %v351, 0
        %v375 = vsel %vm212, %v352, 0
        %377 = vmatpush.bf16.msra.mxu0 0
        %378 = vmatpush.bf16.msra.mxu0 0
        %379 = vmatpush.bf16.msra.mxu0 0
        %380 = vmatpush.bf16.msra.mxu0 0
        %381 = vmatpush.bf16.msra.mxu0 0
        %382 = vmatpush.bf16.msra.mxu0 0
        %383 = vmatpush.bf16.msra.mxu0 0
        %384 = vmatpush.bf16.msra.mxu0 %v357
        %385 = vmatmul.bf16.gmra.mxu0 %v360
        %v386 = vpop.f32.mrf.mxu0
        %v387 = vadd.f32 0.0, %v386
        %v388 = vpop.f32.mrf.mxu0
        %v389 = vadd.f32 0.0, %v388
        %390 = vmatmul.bf16.gmra.mxu0 %v363
        %v391 = vpop.f32.mrf.mxu0
        %v392 = vadd.f32 0.0, %v391
        %v393 = vpop.f32.mrf.mxu0
        %v394 = vadd.f32 0.0, %v393
        %395 = vmatmul.bf16.gmra.mxu0 %v366
        %v396 = vpop.f32.mrf.mxu0
        %v397 = vadd.f32 0.0, %v396
        %v398 = vpop.f32.mrf.mxu0
        %v399 = vadd.f32 0.0, %v398
        %400 = vmatmul.bf16.gmra.mxu0 %v369
        %v401 = vpop.f32.mrf.mxu0
        %v402 = vadd.f32 0.0, %v401
        %v403 = vpop.f32.mrf.mxu0
        %v404 = vadd.f32 0.0, %v403
        %405 = vmatmul.bf16.gmra.mxu0 %v372
        %v406 = vpop.f32.mrf.mxu0
        %v407 = vadd.f32 0.0, %v406
        %v408 = vpop.f32.mrf.mxu0
        %v409 = vadd.f32 0.0, %v408
        %410 = vmatmul.bf16.gmra.mxu0 %v375
        %v411 = vpop.f32.mrf.mxu0
        %v412 = vadd.f32 0.0, %v411
        %v413 = vpop.f32.mrf.mxu0
        %v414 = vadd.f32 0.0, %v413
        %415 = vdwg.mxu0
        %416 = vst [vmem:[%s191] sm:$0xff] %v387
        %417 = vst [vmem:[%s191 + $0x8] sm:$0xff] %v389
        %418 = vst [vmem:[%s191 + $0x10] sm:$0xff] %v392
        %419 = vst [vmem:[%s191 + $0x18] sm:$0xff] %v394
        %s420 = scalar_lea.vmem %s191, 32 [#allocation6]
        %421 = vst [vmem:[%s420] sm:$0xff] %v397
        %422 = vst [vmem:[%s420 + $0x8] sm:$0xff] %v399
        %423 = vst [vmem:[%s420 + $0x10] sm:$0xff] %v402
        %424 = vst [vmem:[%s420 + $0x18] sm:$0xff] %v404
        %s425 = scalar_lea.vmem %s191, 64 [#allocation6]
        %426 = vst [vmem:[%s425] sm:$0xff] %v407
        %427 = vst [vmem:[%s425 + $0x8] sm:$0xff] %v409
        %428 = vst [vmem:[%s425 + $0x10] sm:$0xff] %v412
        %429 = vst [vmem:[%s425 + $0x18] sm:$0xff] %v414
        %s430 = sand.u32 %s96, 1
        %s431 = scalar_lea.sflag [#allocation5], %s430
        %s432 = sand.u32 %s96, 1
        %s433 = smul.addr %s432, 96
        %s434 = scalar_lea.vmem [#allocation6], %s433
        // Predicated region
        $region37: #{tpu_custom_call.1} parent=31 // pred_check
          %p435 = pneg %p106
        $region38: #{tpu_custom_call.1} parent=31 // pred_check_branch
          %437 = sbr.rel (%p435) target = $region40
        $region39: #{tpu_custom_call.1} parent=31 // pred_region
          %s438 = smul.u32 3, %s20
          %440 = vsyncadd %s431, 0
          %s441 = smul.addr %s438, 4
          %s442 = smul.addr %s441, 8
          %s443 = scalar_lea.hbm %s3, %s442
          %s444 = sshll.u32 %s434, 4
          %s445 = int_to_ptr.vmem [resolvable:$true] %s444
          %s446 = sshll.u32 %s443, 4
          %s447 = int_to_ptr.hbm [resolvable:$true] %s446
          %452 = dma.vmem_to_hbm [thread:$0]  %s445, 1536, %s447, %s431, 128, 128, 8
        $region40: #{tpu_custom_call.1} parent=31 // pred_fallthru
          _
      $region32: #{tpu_custom_call.1} parent=5 // pred_fallthru
        _
      %p453 = scmp.le.s32.totalorder 2, %s15
      // Predicated region
      $region41: #{tpu_custom_call.1} parent=5 // pred_check
        %p454 = pneg %p453
      $region42: #{tpu_custom_call.1} parent=5 // pred_check_branch
        %456 = sbr.rel (%p454) target = $region44
      $region43: #{tpu_custom_call.1} parent=5 // pred_region
        %s457 = ssub.s32 %s15, 2
        // Predicated region
        $region45: #{tpu_custom_call.1} parent=43 // pred_check
          %p458 = pneg %p112
        $region46: #{tpu_custom_call.1} parent=43 // pred_check_branch
          %460 = sbr.rel (%p458) target = $region48
        $region47: #{tpu_custom_call.1} parent=43 // pred_region
          %s461 = sand.u32 %s97, 1
          %s462 = scalar_lea.sflag [#allocation5], %s461
          %s463 = sand.u32 %s97, 1
          %s464 = smul.addr %s463, 96
          %s465 = scalar_lea.vmem [#allocation6], %s464
          %467 = dma.done %s462, 1536
        $region48: #{tpu_custom_call.1} parent=43 // pred_fallthru
          _
      $region44: #{tpu_custom_call.1} parent=5 // pred_fallthru
        _
    $region6: #{tpu_custom_call.1} parent=1 // loop_footer
      %s19 = sadd.s32 1, %s15
    $region7: #{tpu_custom_call.1} parent=1 // loop_footer_branch
      %14 = sbr.rel target = $region3
    $region8: #{tpu_custom_call.1} parent=1 // loop_exit
      _
    %468 = vsyncpa [#allocation4], 1
    %s469 = scalar_lea.sflag [#allocation4], 1
    %470 = vsyncpa %s469, 1
    %471 = vsyncpa [#allocation5], 1
    %s472 = scalar_lea.sflag [#allocation5], 1
    %473 = vsyncpa %s472, 1

</llo_original>
